<compile_context>
chip_gen: v7x
topology: tpu7x:2x2x1
jax: 0.10.0
libtpu: 0.0.40
codegen_flags: <defaults>
</compile_context>

<pallas_src>
import functools
import math

import jax
import jax.numpy as jnp
from jax import lax
from jax.experimental import pallas as pl
from jax.experimental.pallas import tpu as pltpu


def _round_up(x, m):
    return (x + m - 1) // m * m


def fasttext_kernel(idx_ref, emb_ref, w_ref, b_ref, out_ref, *, n_tokens, inv_s):
    """One batch tile: token counts -> pooled embedding -> logits.

    idx_ref : (TILE_B, 3*S)   int32   concatenated cbow/bigram/trigram ids
    emb_ref : (V_pad, D_pad)  float32 shared embedding table
    w_ref   : (D_pad, C_pad)  float32 fc weight (transposed vs. torch layout)
    b_ref   : (1, C_pad)      float32 fc bias
    out_ref : (TILE_B, C_pad) float32 logits
    """
    tile_b = idx_ref.shape[0]
    v_pad = emb_ref.shape[0]

    idx = idx_ref[...]                                            # (TILE_B, 3S)
    iota_v = lax.broadcasted_iota(jnp.int32, (tile_b, v_pad), 1)  # (TILE_B, V)

    # Bag-of-words token counts.  3*S is small and static -> fully unrolled,
    # pure VPU compares/adds; OOB ids contribute nothing (safe by construction).
    counts = jnp.zeros((tile_b, v_pad), jnp.float32)
    for t in range(n_tokens):
        tok = idx[:, t:t + 1]                                     # (TILE_B, 1)
        counts = counts + (iota_v == tok).astype(jnp.float32)

    # Pooled embeddings: (TILE_B, V) @ (V, D) on the MXU, then mean over S.
    pooled = jnp.dot(counts, emb_ref[...],
                     preferred_element_type=jnp.float32) * inv_s

    # Dropout (eval mode) is the identity; classifier head on the MXU.
    out_ref[...] = (
        jnp.dot(pooled, w_ref[...], preferred_element_type=jnp.float32)
        + b_ref[...]
    )


def fasttext_forward(idx_cbow, idx_bigram, idx_trigram, emb, fc_w, fc_b,
                     *, tile_b=128):
    B, S = idx_cbow.shape
    V, D = emb.shape
    C = fc_w.shape[1]

    # Lane/sublane-friendly zero padding (numerically inert).
    tile_b = min(tile_b, _round_up(B, 8))
    B_pad = _round_up(B, tile_b)
    V_pad = _round_up(V, 128)
    D_pad = _round_up(D, 128)
    C_pad = _round_up(C, 128)

    idx_all = jnp.concatenate(
        [idx_cbow, idx_bigram, idx_trigram], axis=1).astype(jnp.int32)  # (B, 3S)
    idx_all = jnp.pad(idx_all, ((0, B_pad - B), (0, 0)))
    emb_p = jnp.pad(emb.astype(jnp.float32), ((0, V_pad - V), (0, D_pad - D)))
    w_p = jnp.pad(fc_w.astype(jnp.float32), ((0, D_pad - D), (0, C_pad - C)))
    b_p = jnp.pad(fc_b.reshape(1, C).astype(jnp.float32),
                  ((0, 0), (0, C_pad - C)))

    n_tokens = 3 * S
    grid = (B_pad // tile_b,)

    kernel = functools.partial(fasttext_kernel, n_tokens=n_tokens,
                               inv_s=1.0 / float(S))

    out = pl.pallas_call(
        kernel,
        out_shape=jax.ShapeDtypeStruct((B_pad, C_pad), jnp.float32),
        grid_spec=pltpu.PrefetchScalarGridSpec(
            num_scalar_prefetch=0,
            grid=grid,
            in_specs=[
                pl.BlockSpec((tile_b, n_tokens), lambda i: (i, 0)),   # token ids
                pl.BlockSpec((V_pad, D_pad), lambda i: (0, 0)),       # embedding
                pl.BlockSpec((D_pad, C_pad), lambda i: (0, 0)),       # fc weight
                pl.BlockSpec((1, C_pad), lambda i: (0, 0)),           # fc bias
            ],
            out_specs=pl.BlockSpec((tile_b, C_pad), lambda i: (i, 0)),
        ),
        compiler_params=pltpu.CompilerParams(
            dimension_semantics=("parallel",)),
    )(idx_all, emb_p, w_p, b_p)

    return out[:B, :C]


def reference_forward(idx_cbow, idx_bigram, idx_trigram, emb, fc_w, fc_b):
    e0 = jnp.take(emb, idx_cbow, axis=0)
    e1 = jnp.take(emb, idx_bigram, axis=0)
    e2 = jnp.take(emb, idx_trigram, axis=0)
    out = (e0 + e1 + e2).mean(axis=1)
    return out @ fc_w + fc_b


if __name__ == "__main__":
    # model hyperparams (hidden_size is unused by the PyTorch module's forward)
    embed_num = 64     # vocab size V
    embed_dim = 32     # D
    class_num = 8      # C
    batch = 2          # B
    seq = 8            # S

    key = jax.random.PRNGKey(0)
    k_idx0, k_idx1, k_idx2, k_emb, k_w, k_b = jax.random.split(key, 6)

    # deterministic synthetic inputs: x is a tuple of 3 index tensors (B, S)
    idx_cbow    = jax.random.randint(k_idx0, (batch, seq), 0, embed_num, dtype=jnp.int32)
    idx_bigram  = jax.random.randint(k_idx1, (batch, seq), 0, embed_num, dtype=jnp.int32)
    idx_trigram = jax.random.randint(k_idx2, (batch, seq), 0, embed_num, dtype=jnp.int32)

    # deterministic parameter init mirroring PyTorch defaults:
    #   nn.Embedding -> N(0, 1); nn.Linear -> U(-1/sqrt(fan_in), 1/sqrt(fan_in))
    emb = jax.random.normal(k_emb, (embed_num, embed_dim), dtype=jnp.float32)
    bound = 1.0 / math.sqrt(embed_dim)
    fc_w = jax.random.uniform(k_w, (embed_dim, class_num), jnp.float32, -bound, bound)
    fc_b = jax.random.uniform(k_b, (1, class_num), jnp.float32, -bound, bound)

    logits = fasttext_forward(idx_cbow, idx_bigram, idx_trigram, emb, fc_w, fc_b)
    logits = jax.block_until_ready(logits)

    ref = reference_forward(idx_cbow, idx_bigram, idx_trigram, emb, fc_w, fc_b)
    assert logits.shape == (batch, class_num)
    assert jnp.allclose(logits, ref, atol=1e-4, rtol=1e-4), "mismatch vs reference"

    print("KERNEL_OK")
</pallas_src>

<mosaic_0001>
module attributes {stable_mosaic.version = 11 : i64} {
  func.func @fasttext_kernel(%arg0: i32, %arg1: memref<8x24xi32, #tpu.memory_space<vmem>>, %arg2: memref<128x128xf32, #tpu.memory_space<vmem>>, %arg3: memref<128x128xf32, #tpu.memory_space<vmem>>, %arg4: memref<1x128xf32, #tpu.memory_space<vmem>>, %arg5: memref<8x128xf32, #tpu.memory_space<vmem>>) attributes {dimension_semantics = [#tpu.dimension_semantics<parallel>], iteration_bounds = array<i64: 1>, scalar_prefetch = 0 : i64, scratch_operands = 0 : i64, tpu.core_type = #tpu.core_type<tc>, window_params = [{transform_indices = @transform_0, window_bounds = array<i64: 8, 24>}, {pipeline_mode = #tpu.pipeline_mode<synchronous>, transform_indices = @transform_1, window_bounds = array<i64: 128, 128>}, {pipeline_mode = #tpu.pipeline_mode<synchronous>, transform_indices = @transform_2, window_bounds = array<i64: 128, 128>}, {pipeline_mode = #tpu.pipeline_mode<synchronous>, transform_indices = @transform_3, window_bounds = array<i64: 1, 128>}, {transform_indices = @transform_4, window_bounds = array<i64: 8, 128>}]} {
    %c0 = arith.constant 0 : index
    %c0_0 = arith.constant 0 : index
    %0 = vector.load %arg1[%c0, %c0_0] : memref<8x24xi32, #tpu.memory_space<vmem>>, vector<8x24xi32>
    %1 = tpu.iota {dimensions = array<i32: 1>} : vector<8x128xi32>
    %cst = arith.constant 0.000000e+00 : f32
    %2 = vector.broadcast %cst : f32 to vector<8x128xf32>
    %3 = vector.extract_strided_slice %0 {offsets = [0, 0], sizes = [8, 1], strides = [1, 1]} : vector<8x24xi32> to vector<8x1xi32>
    %4 = vector.broadcast %3 : vector<8x1xi32> to vector<8x128xi32>
    %5 = arith.cmpi eq, %1, %4 : vector<8x128xi32>
    %6 = arith.extui %5 : vector<8x128xi1> to vector<8x128xi32>
    %7 = arith.sitofp %6 : vector<8x128xi32> to vector<8x128xf32>
    %8 = arith.addf %2, %7 : vector<8x128xf32>
    %9 = vector.extract_strided_slice %0 {offsets = [0, 1], sizes = [8, 1], strides = [1, 1]} : vector<8x24xi32> to vector<8x1xi32>
    %10 = vector.broadcast %9 : vector<8x1xi32> to vector<8x128xi32>
    %11 = arith.cmpi eq, %1, %10 : vector<8x128xi32>
    %12 = arith.extui %11 : vector<8x128xi1> to vector<8x128xi32>
    %13 = arith.sitofp %12 : vector<8x128xi32> to vector<8x128xf32>
    %14 = arith.addf %8, %13 : vector<8x128xf32>
    %15 = vector.extract_strided_slice %0 {offsets = [0, 2], sizes = [8, 1], strides = [1, 1]} : vector<8x24xi32> to vector<8x1xi32>
    %16 = vector.broadcast %15 : vector<8x1xi32> to vector<8x128xi32>
    %17 = arith.cmpi eq, %1, %16 : vector<8x128xi32>
    %18 = arith.extui %17 : vector<8x128xi1> to vector<8x128xi32>
    %19 = arith.sitofp %18 : vector<8x128xi32> to vector<8x128xf32>
    %20 = arith.addf %14, %19 : vector<8x128xf32>
    %21 = vector.extract_strided_slice %0 {offsets = [0, 3], sizes = [8, 1], strides = [1, 1]} : vector<8x24xi32> to vector<8x1xi32>
    %22 = vector.broadcast %21 : vector<8x1xi32> to vector<8x128xi32>
    %23 = arith.cmpi eq, %1, %22 : vector<8x128xi32>
    %24 = arith.extui %23 : vector<8x128xi1> to vector<8x128xi32>
    %25 = arith.sitofp %24 : vector<8x128xi32> to vector<8x128xf32>
    %26 = arith.addf %20, %25 : vector<8x128xf32>
    %27 = vector.extract_strided_slice %0 {offsets = [0, 4], sizes = [8, 1], strides = [1, 1]} : vector<8x24xi32> to vector<8x1xi32>
    %28 = vector.broadcast %27 : vector<8x1xi32> to vector<8x128xi32>
    %29 = arith.cmpi eq, %1, %28 : vector<8x128xi32>
    %30 = arith.extui %29 : vector<8x128xi1> to vector<8x128xi32>
    %31 = arith.sitofp %30 : vector<8x128xi32> to vector<8x128xf32>
    %32 = arith.addf %26, %31 : vector<8x128xf32>
    %33 = vector.extract_strided_slice %0 {offsets = [0, 5], sizes = [8, 1], strides = [1, 1]} : vector<8x24xi32> to vector<8x1xi32>
    %34 = vector.broadcast %33 : vector<8x1xi32> to vector<8x128xi32>
    %35 = arith.cmpi eq, %1, %34 : vector<8x128xi32>
    %36 = arith.extui %35 : vector<8x128xi1> to vector<8x128xi32>
    %37 = arith.sitofp %36 : vector<8x128xi32> to vector<8x128xf32>
    %38 = arith.addf %32, %37 : vector<8x128xf32>
    %39 = vector.extract_strided_slice %0 {offsets = [0, 6], sizes = [8, 1], strides = [1, 1]} : vector<8x24xi32> to vector<8x1xi32>
    %40 = vector.broadcast %39 : vector<8x1xi32> to vector<8x128xi32>
    %41 = arith.cmpi eq, %1, %40 : vector<8x128xi32>
    %42 = arith.extui %41 : vector<8x128xi1> to vector<8x128xi32>
    %43 = arith.sitofp %42 : vector<8x128xi32> to vector<8x128xf32>
    %44 = arith.addf %38, %43 : vector<8x128xf32>
    %45 = vector.extract_strided_slice %0 {offsets = [0, 7], sizes = [8, 1], strides = [1, 1]} : vector<8x24xi32> to vector<8x1xi32>
    %46 = vector.broadcast %45 : vector<8x1xi32> to vector<8x128xi32>
    %47 = arith.cmpi eq, %1, %46 : vector<8x128xi32>
    %48 = arith.extui %47 : vector<8x128xi1> to vector<8x128xi32>
    %49 = arith.sitofp %48 : vector<8x128xi32> to vector<8x128xf32>
    %50 = arith.addf %44, %49 : vector<8x128xf32>
    %51 = vector.extract_strided_slice %0 {offsets = [0, 8], sizes = [8, 1], strides = [1, 1]} : vector<8x24xi32> to vector<8x1xi32>
    %52 = vector.broadcast %51 : vector<8x1xi32> to vector<8x128xi32>
    %53 = arith.cmpi eq, %1, %52 : vector<8x128xi32>
    %54 = arith.extui %53 : vector<8x128xi1> to vector<8x128xi32>
    %55 = arith.sitofp %54 : vector<8x128xi32> to vector<8x128xf32>
    %56 = arith.addf %50, %55 : vector<8x128xf32>
    %57 = vector.extract_strided_slice %0 {offsets = [0, 9], sizes = [8, 1], strides = [1, 1]} : vector<8x24xi32> to vector<8x1xi32>
    %58 = vector.broadcast %57 : vector<8x1xi32> to vector<8x128xi32>
    %59 = arith.cmpi eq, %1, %58 : vector<8x128xi32>
    %60 = arith.extui %59 : vector<8x128xi1> to vector<8x128xi32>
    %61 = arith.sitofp %60 : vector<8x128xi32> to vector<8x128xf32>
    %62 = arith.addf %56, %61 : vector<8x128xf32>
    %63 = vector.extract_strided_slice %0 {offsets = [0, 10], sizes = [8, 1], strides = [1, 1]} : vector<8x24xi32> to vector<8x1xi32>
    %64 = vector.broadcast %63 : vector<8x1xi32> to vector<8x128xi32>
    %65 = arith.cmpi eq, %1, %64 : vector<8x128xi32>
    %66 = arith.extui %65 : vector<8x128xi1> to vector<8x128xi32>
    %67 = arith.sitofp %66 : vector<8x128xi32> to vector<8x128xf32>
    %68 = arith.addf %62, %67 : vector<8x128xf32>
    %69 = vector.extract_strided_slice %0 {offsets = [0, 11], sizes = [8, 1], strides = [1, 1]} : vector<8x24xi32> to vector<8x1xi32>
    %70 = vector.broadcast %69 : vector<8x1xi32> to vector<8x128xi32>
    %71 = arith.cmpi eq, %1, %70 : vector<8x128xi32>
    %72 = arith.extui %71 : vector<8x128xi1> to vector<8x128xi32>
    %73 = arith.sitofp %72 : vector<8x128xi32> to vector<8x128xf32>
    %74 = arith.addf %68, %73 : vector<8x128xf32>
    %75 = vector.extract_strided_slice %0 {offsets = [0, 12], sizes = [8, 1], strides = [1, 1]} : vector<8x24xi32> to vector<8x1xi32>
    %76 = vector.broadcast %75 : vector<8x1xi32> to vector<8x128xi32>
    %77 = arith.cmpi eq, %1, %76 : vector<8x128xi32>
    %78 = arith.extui %77 : vector<8x128xi1> to vector<8x128xi32>
    %79 = arith.sitofp %78 : vector<8x128xi32> to vector<8x128xf32>
    %80 = arith.addf %74, %79 : vector<8x128xf32>
    %81 = vector.extract_strided_slice %0 {offsets = [0, 13], sizes = [8, 1], strides = [1, 1]} : vector<8x24xi32> to vector<8x1xi32>
    %82 = vector.broadcast %81 : vector<8x1xi32> to vector<8x128xi32>
    %83 = arith.cmpi eq, %1, %82 : vector<8x128xi32>
    %84 = arith.extui %83 : vector<8x128xi1> to vector<8x128xi32>
    %85 = arith.sitofp %84 : vector<8x128xi32> to vector<8x128xf32>
    %86 = arith.addf %80, %85 : vector<8x128xf32>
    %87 = vector.extract_strided_slice %0 {offsets = [0, 14], sizes = [8, 1], strides = [1, 1]} : vector<8x24xi32> to vector<8x1xi32>
    %88 = vector.broadcast %87 : vector<8x1xi32> to vector<8x128xi32>
    %89 = arith.cmpi eq, %1, %88 : vector<8x128xi32>
    %90 = arith.extui %89 : vector<8x128xi1> to vector<8x128xi32>
    %91 = arith.sitofp %90 : vector<8x128xi32> to vector<8x128xf32>
    %92 = arith.addf %86, %91 : vector<8x128xf32>
    %93 = vector.extract_strided_slice %0 {offsets = [0, 15], sizes = [8, 1], strides = [1, 1]} : vector<8x24xi32> to vector<8x1xi32>
    %94 = vector.broadcast %93 : vector<8x1xi32> to vector<8x128xi32>
    %95 = arith.cmpi eq, %1, %94 : vector<8x128xi32>
    %96 = arith.extui %95 : vector<8x128xi1> to vector<8x128xi32>
    %97 = arith.sitofp %96 : vector<8x128xi32> to vector<8x128xf32>
    %98 = arith.addf %92, %97 : vector<8x128xf32>
    %99 = vector.extract_strided_slice %0 {offsets = [0, 16], sizes = [8, 1], strides = [1, 1]} : vector<8x24xi32> to vector<8x1xi32>
    %100 = vector.broadcast %99 : vector<8x1xi32> to vector<8x128xi32>
    %101 = arith.cmpi eq, %1, %100 : vector<8x128xi32>
    %102 = arith.extui %101 : vector<8x128xi1> to vector<8x128xi32>
    %103 = arith.sitofp %102 : vector<8x128xi32> to vector<8x128xf32>
    %104 = arith.addf %98, %103 : vector<8x128xf32>
    %105 = vector.extract_strided_slice %0 {offsets = [0, 17], sizes = [8, 1], strides = [1, 1]} : vector<8x24xi32> to vector<8x1xi32>
    %106 = vector.broadcast %105 : vector<8x1xi32> to vector<8x128xi32>
    %107 = arith.cmpi eq, %1, %106 : vector<8x128xi32>
    %108 = arith.extui %107 : vector<8x128xi1> to vector<8x128xi32>
    %109 = arith.sitofp %108 : vector<8x128xi32> to vector<8x128xf32>
    %110 = arith.addf %104, %109 : vector<8x128xf32>
    %111 = vector.extract_strided_slice %0 {offsets = [0, 18], sizes = [8, 1], strides = [1, 1]} : vector<8x24xi32> to vector<8x1xi32>
    %112 = vector.broadcast %111 : vector<8x1xi32> to vector<8x128xi32>
    %113 = arith.cmpi eq, %1, %112 : vector<8x128xi32>
    %114 = arith.extui %113 : vector<8x128xi1> to vector<8x128xi32>
    %115 = arith.sitofp %114 : vector<8x128xi32> to vector<8x128xf32>
    %116 = arith.addf %110, %115 : vector<8x128xf32>
    %117 = vector.extract_strided_slice %0 {offsets = [0, 19], sizes = [8, 1], strides = [1, 1]} : vector<8x24xi32> to vector<8x1xi32>
    %118 = vector.broadcast %117 : vector<8x1xi32> to vector<8x128xi32>
    %119 = arith.cmpi eq, %1, %118 : vector<8x128xi32>
    %120 = arith.extui %119 : vector<8x128xi1> to vector<8x128xi32>
    %121 = arith.sitofp %120 : vector<8x128xi32> to vector<8x128xf32>
    %122 = arith.addf %116, %121 : vector<8x128xf32>
    %123 = vector.extract_strided_slice %0 {offsets = [0, 20], sizes = [8, 1], strides = [1, 1]} : vector<8x24xi32> to vector<8x1xi32>
    %124 = vector.broadcast %123 : vector<8x1xi32> to vector<8x128xi32>
    %125 = arith.cmpi eq, %1, %124 : vector<8x128xi32>
    %126 = arith.extui %125 : vector<8x128xi1> to vector<8x128xi32>
    %127 = arith.sitofp %126 : vector<8x128xi32> to vector<8x128xf32>
    %128 = arith.addf %122, %127 : vector<8x128xf32>
    %129 = vector.extract_strided_slice %0 {offsets = [0, 21], sizes = [8, 1], strides = [1, 1]} : vector<8x24xi32> to vector<8x1xi32>
    %130 = vector.broadcast %129 : vector<8x1xi32> to vector<8x128xi32>
    %131 = arith.cmpi eq, %1, %130 : vector<8x128xi32>
    %132 = arith.extui %131 : vector<8x128xi1> to vector<8x128xi32>
    %133 = arith.sitofp %132 : vector<8x128xi32> to vector<8x128xf32>
    %134 = arith.addf %128, %133 : vector<8x128xf32>
    %135 = vector.extract_strided_slice %0 {offsets = [0, 22], sizes = [8, 1], strides = [1, 1]} : vector<8x24xi32> to vector<8x1xi32>
    %136 = vector.broadcast %135 : vector<8x1xi32> to vector<8x128xi32>
    %137 = arith.cmpi eq, %1, %136 : vector<8x128xi32>
    %138 = arith.extui %137 : vector<8x128xi1> to vector<8x128xi32>
    %139 = arith.sitofp %138 : vector<8x128xi32> to vector<8x128xf32>
    %140 = arith.addf %134, %139 : vector<8x128xf32>
    %141 = vector.extract_strided_slice %0 {offsets = [0, 23], sizes = [8, 1], strides = [1, 1]} : vector<8x24xi32> to vector<8x1xi32>
    %142 = vector.broadcast %141 : vector<8x1xi32> to vector<8x128xi32>
    %143 = arith.cmpi eq, %1, %142 : vector<8x128xi32>
    %144 = arith.extui %143 : vector<8x128xi1> to vector<8x128xi32>
    %145 = arith.sitofp %144 : vector<8x128xi32> to vector<8x128xf32>
    %146 = arith.addf %140, %145 : vector<8x128xf32>
    %c0_1 = arith.constant 0 : index
    %c0_2 = arith.constant 0 : index
    %147 = vector.load %arg2[%c0_1, %c0_2] : memref<128x128xf32, #tpu.memory_space<vmem>>, vector<128x128xf32>
    %cst_3 = arith.constant dense<0.000000e+00> : vector<8x128xf32>
    %148 = tpu.matmul %146, %147, %cst_3 {dimension_numbers = #tpu.dot_dimension_numbers<[1], [0], [0], [1], [0, 0, 1, 1], [], []>} : vector<8x128xf32>, vector<128x128xf32>, vector<8x128xf32> -> vector<8x128xf32>
    %cst_4 = arith.constant 1.250000e-01 : f32
    %149 = vector.broadcast %cst_4 : f32 to vector<8x128xf32>
    %150 = arith.mulf %148, %149 : vector<8x128xf32>
    %c0_5 = arith.constant 0 : index
    %c0_6 = arith.constant 0 : index
    %151 = vector.load %arg3[%c0_5, %c0_6] : memref<128x128xf32, #tpu.memory_space<vmem>>, vector<128x128xf32>
    %cst_7 = arith.constant dense<0.000000e+00> : vector<8x128xf32>
    %152 = tpu.matmul %150, %151, %cst_7 {dimension_numbers = #tpu.dot_dimension_numbers<[1], [0], [0], [1], [0, 0, 1, 1], [], []>} : vector<8x128xf32>, vector<128x128xf32>, vector<8x128xf32> -> vector<8x128xf32>
    %c0_8 = arith.constant 0 : index
    %c0_9 = arith.constant 0 : index
    %153 = vector.load %arg4[%c0_8, %c0_9] : memref<1x128xf32, #tpu.memory_space<vmem>>, vector<1x128xf32>
    %154 = vector.broadcast %153 : vector<1x128xf32> to vector<8x128xf32>
    %155 = arith.addf %152, %154 : vector<8x128xf32>
    %c0_10 = arith.constant 0 : index
    %c0_11 = arith.constant 0 : index
    %156 = vector.load %arg5[%c0_10, %c0_11] : memref<8x128xf32, #tpu.memory_space<vmem>>, vector<8x128xf32>
    tpu.vector_store %arg5[%c0_10, %c0_11], %155 {strides = array<i32>} : memref<8x128xf32, #tpu.memory_space<vmem>>, vector<8x128xf32>,
    return
  }
  func.func @transform_0(%arg0: i32) -> (i32, i32) {
    %c0_i32 = arith.constant 0 : i32
    %c0_i32_0 = arith.constant 0 : i32
    return %arg0, %c0_i32 : i32, i32
  }
  func.func @transform_1(%arg0: i32) -> (i32, i32) {
    %c0_i32 = arith.constant 0 : i32
    %c0_i32_0 = arith.constant 0 : i32
    %c0_i32_1 = arith.constant 0 : i32
    return %c0_i32, %c0_i32_0 : i32, i32
  }
  func.func @transform_2(%arg0: i32) -> (i32, i32) {
    %c0_i32 = arith.constant 0 : i32
    %c0_i32_0 = arith.constant 0 : i32
    %c0_i32_1 = arith.constant 0 : i32
    return %c0_i32, %c0_i32_0 : i32, i32
  }
  func.func @transform_3(%arg0: i32) -> (i32, i32) {
    %c0_i32 = arith.constant 0 : i32
    %c0_i32_0 = arith.constant 0 : i32
    %c0_i32_1 = arith.constant 0 : i32
    return %c0_i32, %c0_i32_0 : i32, i32
  }
  func.func @transform_4(%arg0: i32) -> (i32, i32) {
    %c0_i32 = arith.constant 0 : i32
    %c0_i32_0 = arith.constant 0 : i32
    return %arg0, %c0_i32 : i32, i32
  }
}

</mosaic_0001>

<llo_original>
// kernel: tpu_custom_call.1
$region0: #{tpu_custom_call.1}
  #allocation0 [shape = 'u32[]', space=smem, size = 0x4, offset = 0x4, fixed_abs, tag = 'smem constant byte address 0x4 - core index']
  #allocation1 [shape = 'u32[144,128]{1,0:T(1,128)}', space=vmem, size = 0x12000, scoped, tag = 'internal scratch']
  %s0 = inlined_call_operand.hbm [shape: s32[8,24], index: 0, kind: input, shape index: {}]
  %s1 = inlined_call_operand.hbm [shape: f32[128,128], index: 1, kind: input, shape index: {}]
  %s2 = inlined_call_operand.hbm [shape: f32[128,128], index: 2, kind: input, shape index: {}]
  %s3 = inlined_call_operand.vmem [shape: f32[1,128], index: 3, kind: input, shape index: {}]
  %s4 = inlined_call_operand.hbm [shape: f32[8,128], index: 4, kind: output, shape index: {}]
  %s5 = sld [smem:[#allocation0]]
  $region38: #{tpu_custom_call.1} parent=0
    _
  %s7 = ssub.s32 1, %s5
  %s8 = scalar_select 0, %s7, %s5
  $region1: #{tpu_custom_call.1} parent=0
    #allocation2 [shape = 'u8[4096]{0}', space=vmem, size = 0x1000, scoped, tag = 'input window, operand 0, single buffered']
    #allocation3 [shape = 's32[1]{0}', space=sflag, size = 0x4, scoped, tag = 'scoped memory for tpu_custom_call.1']
    #allocation4 [shape = 's32[1]{0}', space=sflag, size = 0x4, scoped, tag = 'scoped memory for tpu_custom_call.1']
    #allocation5 [shape = 'u8[65536]{0}', space=vmem, size = 0x10000, scoped, tag = 'input window, operand 1, single buffered']
    #allocation6 [shape = 's32[1]{0}', space=sflag, size = 0x4, scoped, tag = 'scoped memory for tpu_custom_call.1']
    #allocation7 [shape = 'u8[65536]{0}', space=vmem, size = 0x10000, scoped, tag = 'input window, operand 2, single buffered']
    #allocation8 [shape = 'u8[4096]{0}', space=vmem, size = 0x1000, scoped, tag = 'output window, operand 0, single buffered']
    %9 = vsyncpa [#allocation3], 0
    %10 = vsyncpa [#allocation6], 0
    %11 = vsyncpa [#allocation4], 0
    // Predicated region
    $region2: #{tpu_custom_call.1} parent=1 // pred_check
      _
    $region3: #{tpu_custom_call.1} parent=1 // pred_check_branch
      %13 = sbr.rel (0) target = $region5
    $region4: #{tpu_custom_call.1} parent=1 // pred_region
      %s15 = ssub.s32 128, 128
      %16 = vsyncadd [#allocation3], %s15
      %s18 = sshll.u32 [#allocation2], 4
      %s19 = int_to_ptr.vmem [resolvable:$true] %s18
      %21 = dma.hbm_to_vmem [thread:$0]  %s0, 128, %s19, [#allocation3]
    $region5: #{tpu_custom_call.1} parent=1 // pred_fallthru
      _
    // Predicated region
    $region6: #{tpu_custom_call.1} parent=1 // pred_check
      _
    $region7: #{tpu_custom_call.1} parent=1 // pred_check_branch
      %23 = sbr.rel (0) target = $region9
    $region8: #{tpu_custom_call.1} parent=1 // pred_region
      %s25 = ssub.s32 2048, 2048
      %26 = vsyncadd [#allocation6], %s25
      %s27 = sshll.u32 [#allocation5], 4
      %s28 = int_to_ptr.vmem [resolvable:$true] %s27
      %33 = dma.hbm_to_vmem [thread:$0]  %s1, 2048, %s28, [#allocation6], 128, 128, 8
    $region9: #{tpu_custom_call.1} parent=1 // pred_fallthru
      _
    // Predicated region
    $region10: #{tpu_custom_call.1} parent=1 // pred_check
      _
    $region11: #{tpu_custom_call.1} parent=1 // pred_check_branch
      %35 = sbr.rel (0) target = $region13
    $region12: #{tpu_custom_call.1} parent=1 // pred_region
      %s37 = ssub.s32 2048, 2048
      %38 = vsyncadd [#allocation6], %s37
      %s39 = sshll.u32 [#allocation7], 4
      %s40 = int_to_ptr.vmem [resolvable:$true] %s39
      %45 = dma.hbm_to_vmem [thread:$0]  %s2, 2048, %s40, [#allocation6], 128, 128, 8
    $region13: #{tpu_custom_call.1} parent=1 // pred_fallthru
      _
    // Predicated region
    $region14: #{tpu_custom_call.1} parent=1 // pred_check
      _
    $region15: #{tpu_custom_call.1} parent=1 // pred_check_branch
      %47 = sbr.rel (0) target = $region17
    $region16: #{tpu_custom_call.1} parent=1 // pred_region
      _
    $region17: #{tpu_custom_call.1} parent=1 // pred_fallthru
      _
    // Predicated region
    $region18: #{tpu_custom_call.1} parent=1 // pred_check
      _
    $region19: #{tpu_custom_call.1} parent=1 // pred_check_branch
      %49 = sbr.rel (0) target = $region21
    $region20: #{tpu_custom_call.1} parent=1 // pred_region
      %50 = dma.done [#allocation3], 128
    $region21: #{tpu_custom_call.1} parent=1 // pred_fallthru
      _
    // Predicated region
    $region22: #{tpu_custom_call.1} parent=1 // pred_check
      _
    $region23: #{tpu_custom_call.1} parent=1 // pred_check_branch
      %52 = sbr.rel (0) target = $region25
    $region24: #{tpu_custom_call.1} parent=1 // pred_region
      %53 = dma.done [#allocation6], 2048
    $region25: #{tpu_custom_call.1} parent=1 // pred_fallthru
      _
    // Predicated region
    $region26: #{tpu_custom_call.1} parent=1 // pred_check
      _
    $region27: #{tpu_custom_call.1} parent=1 // pred_check_branch
      %55 = sbr.rel (0) target = $region29
    $region28: #{tpu_custom_call.1} parent=1 // pred_region
      %56 = dma.done [#allocation6], 2048
    $region29: #{tpu_custom_call.1} parent=1 // pred_fallthru
      _
    %v57 = vld [vmem:[#allocation2] sm:$0xff]
    %v58 = vlaneseq
    %v59 = vand.u32 %v58, 127
    %60 = vset.pattern.permute.xlu0 0
    %61 = vperm.xlu0 %60, %v57
    %v62 = vpop.permute.xlu0 %61
    %vm63 = vcmp.eq.s32.totalorder %v59, %v62
    %v64 = vsel %vm63, 1, 0
    %v65 = vcvt.s32.f32 %v64
    %v66 = vadd.f32 %v65, 0.0
    %67 = vset.pattern.permute.xlu0 1
    %68 = vperm.xlu0 %67, %v57
    %v69 = vpop.permute.xlu0 %68
    %vm70 = vcmp.eq.s32.totalorder %v59, %v69
    %v71 = vsel %vm70, 1, 0
    %v72 = vcvt.s32.f32 %v71
    %v73 = vadd.f32 %v66, %v72
    %74 = vset.pattern.permute.xlu0 2
    %75 = vperm.xlu0 %74, %v57
    %v76 = vpop.permute.xlu0 %75
    %vm77 = vcmp.eq.s32.totalorder %v59, %v76
    %v78 = vsel %vm77, 1, 0
    %v79 = vcvt.s32.f32 %v78
    %v80 = vadd.f32 %v73, %v79
    %81 = vset.pattern.permute.xlu0 3
    %82 = vperm.xlu0 %81, %v57
    %v83 = vpop.permute.xlu0 %82
    %vm84 = vcmp.eq.s32.totalorder %v59, %v83
    %v85 = vsel %vm84, 1, 0
    %v86 = vcvt.s32.f32 %v85
    %v87 = vadd.f32 %v80, %v86
    %88 = vset.pattern.permute.xlu0 4
    %89 = vperm.xlu0 %88, %v57
    %v90 = vpop.permute.xlu0 %89
    %vm91 = vcmp.eq.s32.totalorder %v59, %v90
    %v92 = vsel %vm91, 1, 0
    %v93 = vcvt.s32.f32 %v92
    %v94 = vadd.f32 %v87, %v93
    %95 = vset.pattern.permute.xlu0 5
    %96 = vperm.xlu0 %95, %v57
    %v97 = vpop.permute.xlu0 %96
    %vm98 = vcmp.eq.s32.totalorder %v59, %v97
    %v99 = vsel %vm98, 1, 0
    %v100 = vcvt.s32.f32 %v99
    %v101 = vadd.f32 %v94, %v100
    %102 = vset.pattern.permute.xlu0 6
    %103 = vperm.xlu0 %102, %v57
    %v104 = vpop.permute.xlu0 %103
    %vm105 = vcmp.eq.s32.totalorder %v59, %v104
    %v106 = vsel %vm105, 1, 0
    %v107 = vcvt.s32.f32 %v106
    %v108 = vadd.f32 %v101, %v107
    %109 = vset.pattern.permute.xlu0 7
    %110 = vperm.xlu0 %109, %v57
    %v111 = vpop.permute.xlu0 %110
    %vm112 = vcmp.eq.s32.totalorder %v59, %v111
    %v113 = vsel %vm112, 1, 0
    %v114 = vcvt.s32.f32 %v113
    %v115 = vadd.f32 %v108, %v114
    %116 = vset.pattern.permute.xlu0 8
    %117 = vperm.xlu0 %116, %v57
    %v118 = vpop.permute.xlu0 %117
    %vm119 = vcmp.eq.s32.totalorder %v59, %v118
    %v120 = vsel %vm119, 1, 0
    %v121 = vcvt.s32.f32 %v120
    %v122 = vadd.f32 %v115, %v121
    %123 = vset.pattern.permute.xlu0 9
    %124 = vperm.xlu0 %123, %v57
    %v125 = vpop.permute.xlu0 %124
    %vm126 = vcmp.eq.s32.totalorder %v59, %v125
    %v127 = vsel %vm126, 1, 0
    %v128 = vcvt.s32.f32 %v127
    %v129 = vadd.f32 %v122, %v128
    %130 = vset.pattern.permute.xlu0 10
    %131 = vperm.xlu0 %130, %v57
    %v132 = vpop.permute.xlu0 %131
    %vm133 = vcmp.eq.s32.totalorder %v59, %v132
    %v134 = vsel %vm133, 1, 0
    %v135 = vcvt.s32.f32 %v134
    %v136 = vadd.f32 %v129, %v135
    %137 = vset.pattern.permute.xlu0 11
    %138 = vperm.xlu0 %137, %v57
    %v139 = vpop.permute.xlu0 %138
    %vm140 = vcmp.eq.s32.totalorder %v59, %v139
    %v141 = vsel %vm140, 1, 0
    %v142 = vcvt.s32.f32 %v141
    %v143 = vadd.f32 %v136, %v142
    %144 = vset.pattern.permute.xlu0 12
    %145 = vperm.xlu0 %144, %v57
    %v146 = vpop.permute.xlu0 %145
    %vm147 = vcmp.eq.s32.totalorder %v59, %v146
    %v148 = vsel %vm147, 1, 0
    %v149 = vcvt.s32.f32 %v148
    %v150 = vadd.f32 %v143, %v149
    %151 = vset.pattern.permute.xlu0 13
    %152 = vperm.xlu0 %151, %v57
    %v153 = vpop.permute.xlu0 %152
    %vm154 = vcmp.eq.s32.totalorder %v59, %v153
    %v155 = vsel %vm154, 1, 0
    %v156 = vcvt.s32.f32 %v155
    %v157 = vadd.f32 %v150, %v156
    %158 = vset.pattern.permute.xlu0 14
    %159 = vperm.xlu0 %158, %v57
    %v160 = vpop.permute.xlu0 %159
    %vm161 = vcmp.eq.s32.totalorder %v59, %v160
    %v162 = vsel %vm161, 1, 0
    %v163 = vcvt.s32.f32 %v162
    %v164 = vadd.f32 %v157, %v163
    %165 = vset.pattern.permute.xlu0 15
    %166 = vperm.xlu0 %165, %v57
    %v167 = vpop.permute.xlu0 %166
    %vm168 = vcmp.eq.s32.totalorder %v59, %v167
    %v169 = vsel %vm168, 1, 0
    %v170 = vcvt.s32.f32 %v169
    %v171 = vadd.f32 %v164, %v170
    %172 = vset.pattern.permute.xlu0 16
    %173 = vperm.xlu0 %172, %v57
    %v174 = vpop.permute.xlu0 %173
    %vm175 = vcmp.eq.s32.totalorder %v59, %v174
    %v176 = vsel %vm175, 1, 0
    %v177 = vcvt.s32.f32 %v176
    %v178 = vadd.f32 %v171, %v177
    %179 = vset.pattern.permute.xlu0 17
    %180 = vperm.xlu0 %179, %v57
    %v181 = vpop.permute.xlu0 %180
    %vm182 = vcmp.eq.s32.totalorder %v59, %v181
    %v183 = vsel %vm182, 1, 0
    %v184 = vcvt.s32.f32 %v183
    %v185 = vadd.f32 %v178, %v184
    %186 = vset.pattern.permute.xlu0 18
    %187 = vperm.xlu0 %186, %v57
    %v188 = vpop.permute.xlu0 %187
    %vm189 = vcmp.eq.s32.totalorder %v59, %v188
    %v190 = vsel %vm189, 1, 0
    %v191 = vcvt.s32.f32 %v190
    %v192 = vadd.f32 %v185, %v191
    %193 = vset.pattern.permute.xlu0 19
    %194 = vperm.xlu0 %193, %v57
    %v195 = vpop.permute.xlu0 %194
    %vm196 = vcmp.eq.s32.totalorder %v59, %v195
    %v197 = vsel %vm196, 1, 0
    %v198 = vcvt.s32.f32 %v197
    %v199 = vadd.f32 %v192, %v198
    %200 = vset.pattern.permute.xlu0 20
    %201 = vperm.xlu0 %200, %v57
    %v202 = vpop.permute.xlu0 %201
    %vm203 = vcmp.eq.s32.totalorder %v59, %v202
    %v204 = vsel %vm203, 1, 0
    %v205 = vcvt.s32.f32 %v204
    %v206 = vadd.f32 %v199, %v205
    %207 = vset.pattern.permute.xlu0 21
    %208 = vperm.xlu0 %207, %v57
    %v209 = vpop.permute.xlu0 %208
    %vm210 = vcmp.eq.s32.totalorder %v59, %v209
    %v211 = vsel %vm210, 1, 0
    %v212 = vcvt.s32.f32 %v211
    %v213 = vadd.f32 %v206, %v212
    %214 = vset.pattern.permute.xlu0 22
    %215 = vperm.xlu0 %214, %v57
    %v216 = vpop.permute.xlu0 %215
    %vm217 = vcmp.eq.s32.totalorder %v59, %v216
    %v218 = vsel %vm217, 1, 0
    %v219 = vcvt.s32.f32 %v218
    %v220 = vadd.f32 %v213, %v219
    %221 = vset.pattern.permute.xlu0 23
    %222 = vperm.xlu0 %221, %v57
    %v223 = vpop.permute.xlu0 %222
    %vm224 = vcmp.eq.s32.totalorder %v59, %v223
    %v225 = vsel %vm224, 1, 0
    %v226 = vcvt.s32.f32 %v225
    %v227 = vadd.f32 %v220, %v226
    %v228 = vld [vmem:[#allocation5] sm:$0xff]
    %v229 = vld [vmem:[#allocation5 + $0x8] sm:$0xff]
    %v230 = vld [vmem:[#allocation5 + $0x10] sm:$0xff]
    %v231 = vld [vmem:[#allocation5 + $0x18] sm:$0xff]
    %v232 = vld [vmem:[#allocation5 + $0x20] sm:$0xff]
    %v233 = vld [vmem:[#allocation5 + $0x28] sm:$0xff]
    %v234 = vld [vmem:[#allocation5 + $0x30] sm:$0xff]
    %v235 = vld [vmem:[#allocation5 + $0x38] sm:$0xff]
    %v236 = vld [vmem:[#allocation5 + $0x40] sm:$0xff]
    %v237 = vld [vmem:[#allocation5 + $0x48] sm:$0xff]
    %v238 = vld [vmem:[#allocation5 + $0x50] sm:$0xff]
    %v239 = vld [vmem:[#allocation5 + $0x58] sm:$0xff]
    %v240 = vld [vmem:[#allocation5 + $0x60] sm:$0xff]
    %v241 = vld [vmem:[#allocation5 + $0x68] sm:$0xff]
    %v242 = vld [vmem:[#allocation5 + $0x70] sm:$0xff]
    %v243 = vld [vmem:[#allocation5 + $0x78] sm:$0xff]
    %244 = vmatprep.subr.mxu0 0.0
    %245 = vmatpush1.msra.mxu0 %v228
    %246 = vmatprep.subr.mxu0 0.0
    %247 = vmatpush1.msra.mxu0 %v229
    %248 = vmatprep.subr.mxu0 0.0
    %249 = vmatpush1.msra.mxu0 %v230
    %250 = vmatprep.subr.mxu0 0.0
    %251 = vmatpush1.msra.mxu0 %v231
    %252 = vmatprep.subr.mxu0 0.0
    %253 = vmatpush1.msra.mxu0 %v232
    %254 = vmatprep.subr.mxu0 0.0
    %255 = vmatpush1.msra.mxu0 %v233
    %256 = vmatprep.subr.mxu0 0.0
    %257 = vmatpush1.msra.mxu0 %v234
    %258 = vmatprep.subr.mxu0 0.0
    %259 = vmatpush1.msra.mxu0 %v235
    %260 = vmatprep.subr.mxu0 0.0
    %261 = vmatpush1.msra.mxu0 %v236
    %262 = vmatprep.subr.mxu0 0.0
    %263 = vmatpush1.msra.mxu0 %v237
    %264 = vmatprep.subr.mxu0 0.0
    %265 = vmatpush1.msra.mxu0 %v238
    %266 = vmatprep.subr.mxu0 0.0
    %267 = vmatpush1.msra.mxu0 %v239
    %268 = vmatprep.subr.mxu0 0.0
    %269 = vmatpush1.msra.mxu0 %v240
    %270 = vmatprep.subr.mxu0 0.0
    %271 = vmatpush1.msra.mxu0 %v241
    %272 = vmatprep.subr.mxu0 0.0
    %273 = vmatpush1.msra.mxu0 %v242
    %274 = vmatprep.subr.mxu0 0.0
    %275 = vmatpush1.msra.mxu0 %v243
    %276 = vmatprep.subr.mxu0 0.0
    %277 = vmatpush1.msra.mxu0 0.0
    %278 = vmatprep.subr.mxu0 0.0
    %279 = vmatpush1.msra.mxu0 0.0
    %280 = vmatprep.subr.mxu0 0.0
    %281 = vmatpush1.msra.mxu0 0.0
    %282 = vmatprep.subr.mxu0 0.0
    %283 = vmatpush1.msra.mxu0 0.0
    %284 = vmatprep.subr.mxu0 0.0
    %285 = vmatpush1.msra.mxu0 0.0
    %286 = vmatprep.subr.mxu0 0.0
    %287 = vmatpush1.msra.mxu0 0.0
    %288 = vmatprep.subr.mxu0 0.0
    %289 = vmatpush1.msra.mxu0 0.0
    %290 = vmatprep.subr.mxu0 0.0
    %291 = vmatpush1.msra.mxu0 0.0
    %292 = vmatprep.subr.mxu0 0.0
    %293 = vmatpush1.msra.mxu0 0.0
    %294 = vmatprep.subr.mxu0 0.0
    %295 = vmatpush1.msra.mxu0 0.0
    %296 = vmatprep.subr.mxu0 0.0
    %297 = vmatpush1.msra.mxu0 0.0
    %298 = vmatprep.subr.mxu0 0.0
    %299 = vmatpush1.msra.mxu0 0.0
    %300 = vmatprep.subr.mxu0 0.0
    %301 = vmatpush1.msra.mxu0 0.0
    %302 = vmatprep.subr.mxu0 0.0
    %303 = vmatpush1.msra.mxu0 0.0
    %304 = vmatprep.subr.mxu0 0.0
    %305 = vmatpush1.msra.mxu0 0.0
    %306 = vmatprep.subr.mxu0 0.0
    %307 = vmatpush1.msra.mxu0 0.0
    %308 = vmatprep.mubr.f32.mxu0 0.0
    %309 = vmatmul.mubr.f32.gmra.mrb[0].mxu0 %v227
    %v310 = vpop.f32.mrb[0].mxu0
    %v311 = vadd.f32 0.0, %v310
    %v312 = vpop.f32.mrb[0].mxu0
    %313 = vdwg.mxu0
    %v314 = vmul.f32 %v311, 0.125
    %v315 = vld [vmem:[#allocation7] sm:$0xff]
    %v316 = vld [vmem:[#allocation7 + $0x8] sm:$0xff]
    %v317 = vld [vmem:[#allocation7 + $0x10] sm:$0xff]
    %v318 = vld [vmem:[#allocation7 + $0x18] sm:$0xff]
    %v319 = vld [vmem:[#allocation7 + $0x20] sm:$0xff]
    %v320 = vld [vmem:[#allocation7 + $0x28] sm:$0xff]
    %v321 = vld [vmem:[#allocation7 + $0x30] sm:$0xff]
    %v322 = vld [vmem:[#allocation7 + $0x38] sm:$0xff]
    %v323 = vld [vmem:[#allocation7 + $0x40] sm:$0xff]
    %v324 = vld [vmem:[#allocation7 + $0x48] sm:$0xff]
    %v325 = vld [vmem:[#allocation7 + $0x50] sm:$0xff]
    %v326 = vld [vmem:[#allocation7 + $0x58] sm:$0xff]
    %v327 = vld [vmem:[#allocation7 + $0x60] sm:$0xff]
    %v328 = vld [vmem:[#allocation7 + $0x68] sm:$0xff]
    %v329 = vld [vmem:[#allocation7 + $0x70] sm:$0xff]
    %v330 = vld [vmem:[#allocation7 + $0x78] sm:$0xff]
    %v331 = vld [vmem:[%s3] sm:$0x1]
    %v333 = vlaneseq
    %v334 = vshrl.u32 %v333, 7
    %v335 = vsub.s32 0, %v334
    %v336 = vrot.slane %v331, %v335
    %338 = vmatprep.subr.mxu0 0.0
    %339 = vmatpush1.msra.mxu0 %v315
    %340 = vmatprep.subr.mxu0 0.0
    %341 = vmatpush1.msra.mxu0 %v316
    %342 = vmatprep.subr.mxu0 0.0
    %343 = vmatpush1.msra.mxu0 %v317
    %344 = vmatprep.subr.mxu0 0.0
    %345 = vmatpush1.msra.mxu0 %v318
    %346 = vmatprep.subr.mxu0 0.0
    %347 = vmatpush1.msra.mxu0 %v319
    %348 = vmatprep.subr.mxu0 0.0
    %349 = vmatpush1.msra.mxu0 %v320
    %350 = vmatprep.subr.mxu0 0.0
    %351 = vmatpush1.msra.mxu0 %v321
    %352 = vmatprep.subr.mxu0 0.0
    %353 = vmatpush1.msra.mxu0 %v322
    %354 = vmatprep.subr.mxu0 0.0
    %355 = vmatpush1.msra.mxu0 %v323
    %356 = vmatprep.subr.mxu0 0.0
    %357 = vmatpush1.msra.mxu0 %v324
    %358 = vmatprep.subr.mxu0 0.0
    %359 = vmatpush1.msra.mxu0 %v325
    %360 = vmatprep.subr.mxu0 0.0
    %361 = vmatpush1.msra.mxu0 %v326
    %362 = vmatprep.subr.mxu0 0.0
    %363 = vmatpush1.msra.mxu0 %v327
    %364 = vmatprep.subr.mxu0 0.0
    %365 = vmatpush1.msra.mxu0 %v328
    %366 = vmatprep.subr.mxu0 0.0
    %367 = vmatpush1.msra.mxu0 %v329
    %368 = vmatprep.subr.mxu0 0.0
    %369 = vmatpush1.msra.mxu0 %v330
    %370 = vmatprep.subr.mxu0 0.0
    %371 = vmatpush1.msra.mxu0 0.0
    %372 = vmatprep.subr.mxu0 0.0
    %373 = vmatpush1.msra.mxu0 0.0
    %374 = vmatprep.subr.mxu0 0.0
    %375 = vmatpush1.msra.mxu0 0.0
    %376 = vmatprep.subr.mxu0 0.0
    %377 = vmatpush1.msra.mxu0 0.0
    %378 = vmatprep.subr.mxu0 0.0
    %379 = vmatpush1.msra.mxu0 0.0
    %380 = vmatprep.subr.mxu0 0.0
    %381 = vmatpush1.msra.mxu0 0.0
    %382 = vmatprep.subr.mxu0 0.0
    %383 = vmatpush1.msra.mxu0 0.0
    %384 = vmatprep.subr.mxu0 0.0
    %385 = vmatpush1.msra.mxu0 0.0
    %386 = vmatprep.subr.mxu0 0.0
    %387 = vmatpush1.msra.mxu0 0.0
    %388 = vmatprep.subr.mxu0 0.0
    %389 = vmatpush1.msra.mxu0 0.0
    %390 = vmatprep.subr.mxu0 0.0
    %391 = vmatpush1.msra.mxu0 0.0
    %392 = vmatprep.subr.mxu0 0.0
    %393 = vmatpush1.msra.mxu0 0.0
    %394 = vmatprep.subr.mxu0 0.0
    %395 = vmatpush1.msra.mxu0 0.0
    %396 = vmatprep.subr.mxu0 0.0
    %397 = vmatpush1.msra.mxu0 0.0
    %398 = vmatprep.subr.mxu0 0.0
    %399 = vmatpush1.msra.mxu0 0.0
    %400 = vmatprep.subr.mxu0 0.0
    %401 = vmatpush1.msra.mxu0 0.0
    %402 = vmatprep.mubr.f32.mxu0 0.0
    %403 = vmatmul.mubr.f32.gmra.mrb[0].mxu0 %v314
    %v404 = vpop.f32.mrb[0].mxu0
    %v405 = vadd.f32 %v336, %v404
    %v406 = vpop.f32.mrb[0].mxu0
    %407 = vdwg.mxu0
    %408 = vst [vmem:[#allocation8] sm:$0xff] %v405
    // Predicated region
    $region30: #{tpu_custom_call.1} parent=1 // pred_check
      _
    $region31: #{tpu_custom_call.1} parent=1 // pred_check_branch
      %410 = sbr.rel (0) target = $region33
    $region32: #{tpu_custom_call.1} parent=1 // pred_region
      %s412 = ssub.s32 128, 128
      %413 = vsyncadd [#allocation4], %s412
      %s415 = sshll.u32 [#allocation8], 4
      %s416 = int_to_ptr.vmem [resolvable:$true] %s415
      %418 = dma.vmem_to_hbm [thread:$0]  %s416, 128, %s4, [#allocation4]
    $region33: #{tpu_custom_call.1} parent=1 // pred_fallthru
      _
    // Predicated region
    $region34: #{tpu_custom_call.1} parent=1 // pred_check
      _
    $region35: #{tpu_custom_call.1} parent=1 // pred_check_branch
      %420 = sbr.rel (0) target = $region37
    $region36: #{tpu_custom_call.1} parent=1 // pred_region
      %421 = dma.done [#allocation4], 128
    $region37: #{tpu_custom_call.1} parent=1 // pred_fallthru
      _
    %422 = vsyncpa [#allocation3], 1
    %423 = vsyncpa [#allocation6], 1
    %424 = vsyncpa [#allocation4], 1

</llo_original>
